<compile_context>
chip_gen: v5e
topology: v5e:2x2
jax: 0.10.0
libtpu: 0.0.40
codegen_flags: <defaults>
</compile_context>

<pallas_src>
import functools

import jax
import jax.numpy as jnp
from jax.experimental import pallas as pl
from jax.experimental.pallas import tpu as pltpu


def _resnet_block_kernel(x_ref, mask_ref, w0_ref, w1_ref, ws_ref,
                         g0_ref, b0_ref, g1_ref, b1_ref, gs_ref, bs_ref,
                         o_ref, *, B, H, W, fin, fhidden, fout,
                         res_ratio, eps, learned_shortcut):
    He, We = H + 2, W + 2              # spatial grid padded by 1 (conv padding)
    N = B * He * We                    # flattened (b, he, we) lane axis
    n_valid = float(B * H * W)
    margin = We + 1                    # covers the largest 3x3 tap offset

    x = x_ref[...]                     # (fin, N): zero ring, image in interior
    mask = mask_ref[...]               # (1, N):  1.0 on the valid HxW interior

    def conv3x3(a, w_mat, cin):
        """3x3 / stride 1 / pad 1 conv as a single im2col matmul.

        a:     (cin, N) activations on the zero-ringed (He, We) grid.
        w_mat: (cout, 9*cin), columns ordered (ky, kx, cin).
        Output is exact at interior positions; ring positions are garbage and
        are masked out of the BN stats / discarded by the wrapper.
        """
        z = jnp.zeros((cin, margin), jnp.float32)
        a_ext = jnp.concatenate([z, a, z], axis=1)        # (cin, N + 2*margin)
        taps = []
        for ky in range(3):
            for kx in range(3):
                d = margin + (ky - 1) * We + (kx - 1)
                taps.append(a_ext[:, d:d + N])            # static lane slice
        patches = jnp.concatenate(taps, axis=0)           # (9*cin, N) im2col
        return jax.lax.dot_general(w_mat, patches, (((1,), (0,)), ((), ())),
                                   preferred_element_type=jnp.float32)

    def bn(y, g, b):
        # training-mode batch stats over the valid HxW positions only
        m = jnp.sum(y * mask, axis=1, keepdims=True) / n_valid
        c = y - m
        v = jnp.sum(c * c * mask, axis=1, keepdims=True) / n_valid
        return c * jax.lax.rsqrt(v + eps) * g + b

    def lrelu(z):
        return jnp.where(z > 0, z, 0.2 * z)

    # ---- conv_0 -> bn2d_0 -> LeakyReLU; zeroing the ring makes h its own
    #      zero padding for conv_1.
    h = lrelu(bn(conv3x3(x, w0_ref[...], fin), g0_ref[...], b0_ref[...])) * mask

    # ---- conv_1 -> bn2d_1
    dx = bn(conv3x3(h, w1_ref[...], fhidden), g1_ref[...], b1_ref[...])

    # ---- shortcut
    if learned_shortcut:
        xs = jax.lax.dot_general(ws_ref[...], x, (((1,), (0,)), ((), ())),
                                 preferred_element_type=jnp.float32)  # 1x1 conv
        xs = bn(xs, gs_ref[...], bs_ref[...])
    else:
        xs = x                          # identity (fin == fout)

    # lane-dense store: (fout, N); interior extraction happens in the wrapper
    o_ref[...] = lrelu(xs + res_ratio * dx)


def resnet_block_forward(x_nchw, params, res_ratio=0.1, eps=1e-5):
    """Pallas forward.  x_nchw: (B, fin, H, W) float32 -> (B, fout, H, W)."""
    w0, w1, ws, g0, b0, g1, b1, gs, bs = params
    B, fin, H, W = x_nchw.shape
    fhidden, fout = w0.shape[-1], w1.shape[-1]
    He, We = H + 2, W + 2
    N = B * He * We
    learned_shortcut = (fin != fout)

    # glue: channels-major + spatial zero-pad by 1, flattened onto the lane axis
    x_c = jnp.transpose(x_nchw, (1, 0, 2, 3)).astype(jnp.float32)   # (fin,B,H,W)
    x_c = jnp.pad(x_c, ((0, 0), (0, 0), (1, 1), (1, 1)))            # (fin,B,He,We)
    x_flat = x_c.reshape(fin, N)

    # interior (valid HxW) mask as a single lane-dense row (1, N) ~ 2.6 KB
    row = (jnp.arange(He) >= 1) & (jnp.arange(He) <= H)
    col = (jnp.arange(We) >= 1) & (jnp.arange(We) <= W)
    m2d = (row[:, None] & col[None, :]).astype(jnp.float32)         # (He, We)
    mask = jnp.broadcast_to(m2d[None], (B, He, We)).reshape(1, N)

    # im2col weight matrices: (Cout, 9*Cin), columns ordered (ky, kx, cin)
    w0_mat = w0.reshape(9 * fin, fhidden).T.astype(jnp.float32)
    w1_mat = w1.reshape(9 * fhidden, fout).T.astype(jnp.float32)
    ws_mat = ws.reshape(fin, fout).T.astype(jnp.float32)

    kernel = functools.partial(
        _resnet_block_kernel, B=B, H=H, W=W, fin=fin, fhidden=fhidden,
        fout=fout, res_ratio=res_ratio, eps=eps,
        learned_shortcut=learned_shortcut)

    vmem = pl.BlockSpec(memory_space=pltpu.MemorySpace.VMEM)
    out_flat = pl.pallas_call(
        kernel,
        out_shape=jax.ShapeDtypeStruct((fout, N), jnp.float32),
        in_specs=[vmem] * 11,
        out_specs=vmem,
        compiler_params=pltpu.CompilerParams(
            vmem_limit_bytes=32 * 1024 * 1024),
    )(x_flat, mask, w0_mat, w1_mat, ws_mat,
      g0.reshape(-1, 1).astype(jnp.float32), b0.reshape(-1, 1).astype(jnp.float32),
      g1.reshape(-1, 1).astype(jnp.float32), b1.reshape(-1, 1).astype(jnp.float32),
      gs.reshape(-1, 1).astype(jnp.float32), bs.reshape(-1, 1).astype(jnp.float32))

    # drop the ring, back to NCHW
    out = out_flat.reshape(fout, B, He, We)[:, :, 1:H + 1, 1:W + 1]
    return jnp.transpose(out, (1, 0, 2, 3))


def resnet_block_ref(x_nchw, params, res_ratio=0.1, eps=1e-5):
    """Pure-JAX reference (mirrors the PyTorch forward, train-mode BN)."""
    w0, w1, ws, g0, b0, g1, b1, gs, bs = params

    def conv(x, w, pad):
        return jax.lax.conv_general_dilated(
            x, w, window_strides=(1, 1), padding=[(pad, pad), (pad, pad)],
            dimension_numbers=('NCHW', 'HWIO', 'NCHW'))

    def bn(y, g, b):
        m = jnp.mean(y, axis=(0, 2, 3), keepdims=True)
        v = jnp.mean((y - m) ** 2, axis=(0, 2, 3), keepdims=True)
        return ((y - m) * jax.lax.rsqrt(v + eps) * g.reshape(1, -1, 1, 1)
                + b.reshape(1, -1, 1, 1))

    def lrelu(z):
        return jnp.where(z > 0, z, 0.2 * z)

    dx = lrelu(bn(conv(x_nchw, w0, 1), g0, b0))
    dx = bn(conv(dx, w1, 1), g1, b1)
    xs = bn(conv(x_nchw, ws, 0), gs, bs)
    return lrelu(xs + res_ratio * dx)


if __name__ == "__main__":
    # ResNetBlock(fin=4, fout=8, bn=True, res_ratio=0.1) -> fhidden = min(4, 8) = 4
    B, fin, fout, H, W = 2, 4, 8, 16, 16
    fhidden = min(fin, fout)

    key = jax.random.PRNGKey(0)
    keys = jax.random.split(key, 10)
    # deterministic synthetic parameters (conv weights in HWIO layout)
    w0 = 0.2 * jax.random.normal(keys[0], (3, 3, fin, fhidden), jnp.float32)
    w1 = 0.2 * jax.random.normal(keys[1], (3, 3, fhidden, fout), jnp.float32)
    ws = 0.2 * jax.random.normal(keys[2], (1, 1, fin, fout), jnp.float32)
    g0 = 1.0 + 0.1 * jax.random.normal(keys[3], (fhidden,), jnp.float32)
    b0 = 0.1 * jax.random.normal(keys[4], (fhidden,), jnp.float32)
    g1 = 1.0 + 0.1 * jax.random.normal(keys[5], (fout,), jnp.float32)
    b1 = 0.1 * jax.random.normal(keys[6], (fout,), jnp.float32)
    gs = 1.0 + 0.1 * jax.random.normal(keys[7], (fout,), jnp.float32)
    bs = 0.1 * jax.random.normal(keys[8], (fout,), jnp.float32)
    params = (w0, w1, ws, g0, b0, g1, b1, gs, bs)

    x = jax.random.normal(keys[9], (B, fin, H, W), jnp.float32)

    out = jax.block_until_ready(resnet_block_forward(x, params))
    assert out.shape == (B, fout, H, W)

    ref = resnet_block_ref(x, params)
    err = float(jnp.max(jnp.abs(out - ref)))
    if not bool(jnp.allclose(out, ref, atol=1e-4, rtol=1e-4)):
        raise AssertionError(f"Pallas result mismatch vs reference: max|err|={err}")
    print("KERNEL_OK")
</pallas_src>

<mosaic_0001>
module attributes {stable_mosaic.version = 11 : i64} {
  func.func @_resnet_block_kernel(%arg0: memref<4x648xf32, #tpu.memory_space<vmem>>, %arg1: memref<1x648xf32, #tpu.memory_space<vmem>>, %arg2: memref<4x36xf32, #tpu.memory_space<vmem>>, %arg3: memref<8x36xf32, #tpu.memory_space<vmem>>, %arg4: memref<8x4xf32, #tpu.memory_space<vmem>>, %arg5: memref<4x1xf32, #tpu.memory_space<vmem>>, %arg6: memref<4x1xf32, #tpu.memory_space<vmem>>, %arg7: memref<8x1xf32, #tpu.memory_space<vmem>>, %arg8: memref<8x1xf32, #tpu.memory_space<vmem>>, %arg9: memref<8x1xf32, #tpu.memory_space<vmem>>, %arg10: memref<8x1xf32, #tpu.memory_space<vmem>>, %arg11: memref<8x648xf32, #tpu.memory_space<vmem>>) attributes {dimension_semantics = [], scalar_prefetch = 0 : i64, scratch_operands = 0 : i64, tpu.core_type = #tpu.core_type<tc>} {
    %c0 = arith.constant 0 : index
    %c0_0 = arith.constant 0 : index
    %0 = vector.load %arg0[%c0, %c0_0] : memref<4x648xf32, #tpu.memory_space<vmem>>, vector<4x648xf32>
    %c0_1 = arith.constant 0 : index
    %c0_2 = arith.constant 0 : index
    %1 = vector.load %arg1[%c0_1, %c0_2] : memref<1x648xf32, #tpu.memory_space<vmem>>, vector<1x648xf32>
    %c0_3 = arith.constant 0 : index
    %c0_4 = arith.constant 0 : index
    %2 = vector.load %arg2[%c0_3, %c0_4] : memref<4x36xf32, #tpu.memory_space<vmem>>, vector<4x36xf32>
    %cst = arith.constant 0.000000e+00 : f32
    %3 = vector.broadcast %cst : f32 to vector<4x19xf32>
    %4 = tpu.concatenate %3, %0, %3 in 1 : vector<4x19xf32>, vector<4x648xf32>, vector<4x19xf32> -> vector<4x686xf32>
    %5 = vector.extract_strided_slice %4 {offsets = [0, 0], sizes = [4, 648], strides = [1, 1]} : vector<4x686xf32> to vector<4x648xf32>
    %6 = vector.extract_strided_slice %4 {offsets = [0, 1], sizes = [4, 648], strides = [1, 1]} : vector<4x686xf32> to vector<4x648xf32>
    %7 = vector.extract_strided_slice %4 {offsets = [0, 2], sizes = [4, 648], strides = [1, 1]} : vector<4x686xf32> to vector<4x648xf32>
    %8 = vector.extract_strided_slice %4 {offsets = [0, 18], sizes = [4, 648], strides = [1, 1]} : vector<4x686xf32> to vector<4x648xf32>
    %9 = vector.extract_strided_slice %4 {offsets = [0, 19], sizes = [4, 648], strides = [1, 1]} : vector<4x686xf32> to vector<4x648xf32>
    %10 = vector.extract_strided_slice %4 {offsets = [0, 20], sizes = [4, 648], strides = [1, 1]} : vector<4x686xf32> to vector<4x648xf32>
    %11 = vector.extract_strided_slice %4 {offsets = [0, 36], sizes = [4, 648], strides = [1, 1]} : vector<4x686xf32> to vector<4x648xf32>
    %12 = vector.extract_strided_slice %4 {offsets = [0, 37], sizes = [4, 648], strides = [1, 1]} : vector<4x686xf32> to vector<4x648xf32>
    %13 = vector.extract_strided_slice %4 {offsets = [0, 38], sizes = [4, 648], strides = [1, 1]} : vector<4x686xf32> to vector<4x648xf32>
    %14 = tpu.concatenate %5, %6, %7, %8, %9, %10, %11, %12, %13 in 0 : vector<4x648xf32>, vector<4x648xf32>, vector<4x648xf32>, vector<4x648xf32>, vector<4x648xf32>, vector<4x648xf32>, vector<4x648xf32>, vector<4x648xf32>, vector<4x648xf32> -> vector<36x648xf32>
    %cst_5 = arith.constant dense<0.000000e+00> : vector<4x648xf32>
    %15 = tpu.matmul %2, %14, %cst_5 {dimension_numbers = #tpu.dot_dimension_numbers<[1], [0], [0], [1], [0, 0, 1, 1], [], []>} : vector<4x36xf32>, vector<36x648xf32>, vector<4x648xf32> -> vector<4x648xf32>
    %c0_6 = arith.constant 0 : index
    %c0_7 = arith.constant 0 : index
    %16 = vector.load %arg5[%c0_6, %c0_7] : memref<4x1xf32, #tpu.memory_space<vmem>>, vector<4x1xf32>
    %c0_8 = arith.constant 0 : index
    %c0_9 = arith.constant 0 : index
    %17 = vector.load %arg6[%c0_8, %c0_9] : memref<4x1xf32, #tpu.memory_space<vmem>>, vector<4x1xf32>
    %18 = vector.broadcast %1 : vector<1x648xf32> to vector<4x648xf32>
    %19 = arith.mulf %15, %18 : vector<4x648xf32>
    %cst_10 = arith.constant dense<0.000000e+00> : vector<4xf32>
    %20 = vector.multi_reduction <add>, %19, %cst_10 [1] : vector<4x648xf32> to vector<4xf32>
    %21 = vector.shape_cast %20 : vector<4xf32> to vector<4x1xf32>
    %cst_11 = arith.constant 5.120000e+02 : f32
    %22 = vector.broadcast %cst_11 : f32 to vector<4x1xf32>
    %23 = arith.divf %21, %22 : vector<4x1xf32>
    %24 = vector.broadcast %23 : vector<4x1xf32> to vector<4x648xf32>
    %25 = arith.subf %15, %24 : vector<4x648xf32>
    %26 = arith.mulf %25, %25 : vector<4x648xf32>
    %27 = vector.broadcast %1 : vector<1x648xf32> to vector<4x648xf32>
    %28 = arith.mulf %26, %27 : vector<4x648xf32>
    %cst_12 = arith.constant dense<0.000000e+00> : vector<4xf32>
    %29 = vector.multi_reduction <add>, %28, %cst_12 [1] : vector<4x648xf32> to vector<4xf32>
    %30 = vector.shape_cast %29 : vector<4xf32> to vector<4x1xf32>
    %cst_13 = arith.constant 5.120000e+02 : f32
    %31 = vector.broadcast %cst_13 : f32 to vector<4x1xf32>
    %32 = arith.divf %30, %31 : vector<4x1xf32>
    %cst_14 = arith.constant 9.99999974E-6 : f32
    %33 = vector.broadcast %cst_14 : f32 to vector<4x1xf32>
    %34 = arith.addf %32, %33 : vector<4x1xf32>
    %35 = math.rsqrt %34 : vector<4x1xf32>
    %36 = vector.broadcast %35 : vector<4x1xf32> to vector<4x648xf32>
    %37 = arith.mulf %25, %36 : vector<4x648xf32>
    %38 = vector.broadcast %16 : vector<4x1xf32> to vector<4x648xf32>
    %39 = arith.mulf %37, %38 : vector<4x648xf32>
    %40 = vector.broadcast %17 : vector<4x1xf32> to vector<4x648xf32>
    %41 = arith.addf %39, %40 : vector<4x648xf32>
    %cst_15 = arith.constant 0.000000e+00 : f32
    %42 = vector.broadcast %cst_15 : f32 to vector<4x648xf32>
    %43 = arith.cmpf ogt, %41, %42 : vector<4x648xf32>
    %cst_16 = arith.constant 2.000000e-01 : f32
    %44 = vector.broadcast %cst_16 : f32 to vector<4x648xf32>
    %45 = arith.mulf %44, %41 : vector<4x648xf32>
    %46 = arith.select %43, %41, %45 : vector<4x648xi1>, vector<4x648xf32>
    %47 = vector.broadcast %1 : vector<1x648xf32> to vector<4x648xf32>
    %48 = arith.mulf %46, %47 : vector<4x648xf32>
    %c0_17 = arith.constant 0 : index
    %c0_18 = arith.constant 0 : index
    %49 = vector.load %arg3[%c0_17, %c0_18] : memref<8x36xf32, #tpu.memory_space<vmem>>, vector<8x36xf32>
    %cst_19 = arith.constant 0.000000e+00 : f32
    %50 = vector.broadcast %cst_19 : f32 to vector<4x19xf32>
    %51 = tpu.concatenate %50, %48, %50 in 1 : vector<4x19xf32>, vector<4x648xf32>, vector<4x19xf32> -> vector<4x686xf32>
    %52 = vector.extract_strided_slice %51 {offsets = [0, 0], sizes = [4, 648], strides = [1, 1]} : vector<4x686xf32> to vector<4x648xf32>
    %53 = vector.extract_strided_slice %51 {offsets = [0, 1], sizes = [4, 648], strides = [1, 1]} : vector<4x686xf32> to vector<4x648xf32>
    %54 = vector.extract_strided_slice %51 {offsets = [0, 2], sizes = [4, 648], strides = [1, 1]} : vector<4x686xf32> to vector<4x648xf32>
    %55 = vector.extract_strided_slice %51 {offsets = [0, 18], sizes = [4, 648], strides = [1, 1]} : vector<4x686xf32> to vector<4x648xf32>
    %56 = vector.extract_strided_slice %51 {offsets = [0, 19], sizes = [4, 648], strides = [1, 1]} : vector<4x686xf32> to vector<4x648xf32>
    %57 = vector.extract_strided_slice %51 {offsets = [0, 20], sizes = [4, 648], strides = [1, 1]} : vector<4x686xf32> to vector<4x648xf32>
    %58 = vector.extract_strided_slice %51 {offsets = [0, 36], sizes = [4, 648], strides = [1, 1]} : vector<4x686xf32> to vector<4x648xf32>
    %59 = vector.extract_strided_slice %51 {offsets = [0, 37], sizes = [4, 648], strides = [1, 1]} : vector<4x686xf32> to vector<4x648xf32>
    %60 = vector.extract_strided_slice %51 {offsets = [0, 38], sizes = [4, 648], strides = [1, 1]} : vector<4x686xf32> to vector<4x648xf32>
    %61 = tpu.concatenate %52, %53, %54, %55, %56, %57, %58, %59, %60 in 0 : vector<4x648xf32>, vector<4x648xf32>, vector<4x648xf32>, vector<4x648xf32>, vector<4x648xf32>, vector<4x648xf32>, vector<4x648xf32>, vector<4x648xf32>, vector<4x648xf32> -> vector<36x648xf32>
    %cst_20 = arith.constant dense<0.000000e+00> : vector<8x648xf32>
    %62 = tpu.matmul %49, %61, %cst_20 {dimension_numbers = #tpu.dot_dimension_numbers<[1], [0], [0], [1], [0, 0, 1, 1], [], []>} : vector<8x36xf32>, vector<36x648xf32>, vector<8x648xf32> -> vector<8x648xf32>
    %c0_21 = arith.constant 0 : index
    %c0_22 = arith.constant 0 : index
    %63 = vector.load %arg7[%c0_21, %c0_22] : memref<8x1xf32, #tpu.memory_space<vmem>>, vector<8x1xf32>
    %c0_23 = arith.constant 0 : index
    %c0_24 = arith.constant 0 : index
    %64 = vector.load %arg8[%c0_23, %c0_24] : memref<8x1xf32, #tpu.memory_space<vmem>>, vector<8x1xf32>
    %65 = vector.broadcast %1 : vector<1x648xf32> to vector<8x648xf32>
    %66 = arith.mulf %62, %65 : vector<8x648xf32>
    %cst_25 = arith.constant dense<0.000000e+00> : vector<8xf32>
    %67 = vector.multi_reduction <add>, %66, %cst_25 [1] : vector<8x648xf32> to vector<8xf32>
    %68 = vector.shape_cast %67 : vector<8xf32> to vector<8x1xf32>
    %cst_26 = arith.constant 5.120000e+02 : f32
    %69 = vector.broadcast %cst_26 : f32 to vector<8x1xf32>
    %70 = arith.divf %68, %69 : vector<8x1xf32>
    %71 = vector.broadcast %70 : vector<8x1xf32> to vector<8x648xf32>
    %72 = arith.subf %62, %71 : vector<8x648xf32>
    %73 = arith.mulf %72, %72 : vector<8x648xf32>
    %74 = vector.broadcast %1 : vector<1x648xf32> to vector<8x648xf32>
    %75 = arith.mulf %73, %74 : vector<8x648xf32>
    %cst_27 = arith.constant dense<0.000000e+00> : vector<8xf32>
    %76 = vector.multi_reduction <add>, %75, %cst_27 [1] : vector<8x648xf32> to vector<8xf32>
    %77 = vector.shape_cast %76 : vector<8xf32> to vector<8x1xf32>
    %cst_28 = arith.constant 5.120000e+02 : f32
    %78 = vector.broadcast %cst_28 : f32 to vector<8x1xf32>
    %79 = arith.divf %77, %78 : vector<8x1xf32>
    %cst_29 = arith.constant 9.99999974E-6 : f32
    %80 = vector.broadcast %cst_29 : f32 to vector<8x1xf32>
    %81 = arith.addf %79, %80 : vector<8x1xf32>
    %82 = math.rsqrt %81 : vector<8x1xf32>
    %83 = vector.broadcast %82 : vector<8x1xf32> to vector<8x648xf32>
    %84 = arith.mulf %72, %83 : vector<8x648xf32>
    %85 = vector.broadcast %63 : vector<8x1xf32> to vector<8x648xf32>
    %86 = arith.mulf %84, %85 : vector<8x648xf32>
    %87 = vector.broadcast %64 : vector<8x1xf32> to vector<8x648xf32>
    %88 = arith.addf %86, %87 : vector<8x648xf32>
    %c0_30 = arith.constant 0 : index
    %c0_31 = arith.constant 0 : index
    %89 = vector.load %arg4[%c0_30, %c0_31] : memref<8x4xf32, #tpu.memory_space<vmem>>, vector<8x4xf32>
    %cst_32 = arith.constant dense<0.000000e+00> : vector<8x648xf32>
    %90 = tpu.matmul %89, %0, %cst_32 {dimension_numbers = #tpu.dot_dimension_numbers<[1], [0], [0], [1], [0, 0, 1, 1], [], []>} : vector<8x4xf32>, vector<4x648xf32>, vector<8x648xf32> -> vector<8x648xf32>
    %c0_33 = arith.constant 0 : index
    %c0_34 = arith.constant 0 : index
    %91 = vector.load %arg9[%c0_33, %c0_34] : memref<8x1xf32, #tpu.memory_space<vmem>>, vector<8x1xf32>
    %c0_35 = arith.constant 0 : index
    %c0_36 = arith.constant 0 : index
    %92 = vector.load %arg10[%c0_35, %c0_36] : memref<8x1xf32, #tpu.memory_space<vmem>>, vector<8x1xf32>
    %93 = vector.broadcast %1 : vector<1x648xf32> to vector<8x648xf32>
    %94 = arith.mulf %90, %93 : vector<8x648xf32>
    %cst_37 = arith.constant dense<0.000000e+00> : vector<8xf32>
    %95 = vector.multi_reduction <add>, %94, %cst_37 [1] : vector<8x648xf32> to vector<8xf32>
    %96 = vector.shape_cast %95 : vector<8xf32> to vector<8x1xf32>
    %cst_38 = arith.constant 5.120000e+02 : f32
    %97 = vector.broadcast %cst_38 : f32 to vector<8x1xf32>
    %98 = arith.divf %96, %97 : vector<8x1xf32>
    %99 = vector.broadcast %98 : vector<8x1xf32> to vector<8x648xf32>
    %100 = arith.subf %90, %99 : vector<8x648xf32>
    %101 = arith.mulf %100, %100 : vector<8x648xf32>
    %102 = vector.broadcast %1 : vector<1x648xf32> to vector<8x648xf32>
    %103 = arith.mulf %101, %102 : vector<8x648xf32>
    %cst_39 = arith.constant dense<0.000000e+00> : vector<8xf32>
    %104 = vector.multi_reduction <add>, %103, %cst_39 [1] : vector<8x648xf32> to vector<8xf32>
    %105 = vector.shape_cast %104 : vector<8xf32> to vector<8x1xf32>
    %cst_40 = arith.constant 5.120000e+02 : f32
    %106 = vector.broadcast %cst_40 : f32 to vector<8x1xf32>
    %107 = arith.divf %105, %106 : vector<8x1xf32>
    %cst_41 = arith.constant 9.99999974E-6 : f32
    %108 = vector.broadcast %cst_41 : f32 to vector<8x1xf32>
    %109 = arith.addf %107, %108 : vector<8x1xf32>
    %110 = math.rsqrt %109 : vector<8x1xf32>
    %111 = vector.broadcast %110 : vector<8x1xf32> to vector<8x648xf32>
    %112 = arith.mulf %100, %111 : vector<8x648xf32>
    %113 = vector.broadcast %91 : vector<8x1xf32> to vector<8x648xf32>
    %114 = arith.mulf %112, %113 : vector<8x648xf32>
    %115 = vector.broadcast %92 : vector<8x1xf32> to vector<8x648xf32>
    %116 = arith.addf %114, %115 : vector<8x648xf32>
    %cst_42 = arith.constant 1.000000e-01 : f32
    %117 = vector.broadcast %cst_42 : f32 to vector<8x648xf32>
    %118 = arith.mulf %117, %88 : vector<8x648xf32>
    %119 = arith.addf %116, %118 : vector<8x648xf32>
    %cst_43 = arith.constant 0.000000e+00 : f32
    %120 = vector.broadcast %cst_43 : f32 to vector<8x648xf32>
    %121 = arith.cmpf ogt, %119, %120 : vector<8x648xf32>
    %cst_44 = arith.constant 2.000000e-01 : f32
    %122 = vector.broadcast %cst_44 : f32 to vector<8x648xf32>
    %123 = arith.mulf %122, %119 : vector<8x648xf32>
    %124 = arith.select %121, %119, %123 : vector<8x648xi1>, vector<8x648xf32>
    %c0_45 = arith.constant 0 : index
    %c0_46 = arith.constant 0 : index
    %125 = vector.load %arg11[%c0_45, %c0_46] : memref<8x648xf32, #tpu.memory_space<vmem>>, vector<8x648xf32>
    tpu.vector_store %arg11[%c0_45, %c0_46], %124 {strides = array<i32>} : memref<8x648xf32, #tpu.memory_space<vmem>>, vector<8x648xf32>,
    return
  }
}

</mosaic_0001>

<llo_original>
// kernel: tpu_custom_call.1
$region0: #{tpu_custom_call.1}
  #allocation0 [shape = 'u32[]', space=smem, size = 0x4, offset = 0x4, fixed_abs, tag = 'smem constant byte address 0x4 - core index']
  #allocation1 [shape = 'u32[72,128]{1,0:T(1,128)}', space=vmem, size = 0x9000, scoped, tag = 'internal scratch']
  %s0 = inlined_call_operand.hbm [shape: f32[4,648], index: 0, kind: input, shape index: {}]
  %s1 = inlined_call_operand.vmem [shape: f32[1,648], index: 1, kind: input, shape index: {}]
  %s2 = inlined_call_operand.vmem [shape: f32[4,36], index: 2, kind: input, shape index: {}]
  %s3 = inlined_call_operand.vmem [shape: f32[8,36], index: 3, kind: input, shape index: {}]
  %s4 = inlined_call_operand.vmem [shape: f32[8,4], index: 4, kind: input, shape index: {}]
  %s5 = inlined_call_operand.vmem [shape: f32[4,1], index: 5, kind: input, shape index: {}]
  %s6 = inlined_call_operand.vmem [shape: f32[4,1], index: 6, kind: input, shape index: {}]
  %s7 = inlined_call_operand.vmem [shape: f32[8,1], index: 7, kind: input, shape index: {}]
  %s8 = inlined_call_operand.vmem [shape: f32[8,1], index: 8, kind: input, shape index: {}]
  %s9 = inlined_call_operand.vmem [shape: f32[8,1], index: 9, kind: input, shape index: {}]
  %s10 = inlined_call_operand.vmem [shape: f32[8,1], index: 10, kind: input, shape index: {}]
  %s11 = inlined_call_operand.hbm [shape: f32[8,648], index: 11, kind: output, shape index: {}]
  %s12 = sld [smem:[#allocation0]]
  $region58: #{tpu_custom_call.1} parent=0
    _
  %s14 = ssub.s32 1, %s12
  %s15 = scalar_select 0, %s14, %s12
  $region1: #{tpu_custom_call.1} parent=0
    #allocation2 [shape = 'u8[12288]{0}', space=vmem, size = 0x3000, scoped, tag = 'input window, operand 0, single buffered']
    #allocation3 [shape = 's32[1]{0}', space=sflag, size = 0x4, scoped, tag = 'scoped memory for tpu_custom_call.1']
    #allocation4 [shape = 's32[1]{0}', space=sflag, size = 0x4, scoped, tag = 'scoped memory for tpu_custom_call.1']
    #allocation5 [shape = 'u8[24576]{0}', space=vmem, size = 0x6000, scoped, tag = 'output window, operand 0, single buffered']
    %16 = vsyncpa [#allocation3], 0
    %17 = vsyncpa [#allocation4], 0
    // Predicated region
    $region2: #{tpu_custom_call.1} parent=1 // pred_check
      _
    $region3: #{tpu_custom_call.1} parent=1 // pred_check_branch
      %19 = sbr.rel (0) target = $region5
    $region4: #{tpu_custom_call.1} parent=1 // pred_region
      %21 = vsyncadd [#allocation3], 0
      %s23 = sshll.u32 %s0, 4
      %s24 = int_to_ptr.hbm [resolvable:$true] %s23
      %s25 = sshll.u32 [#allocation2], 4
      %s26 = int_to_ptr.vmem [resolvable:$true] %s25
      %28 = dma.hbm_to_vmem [thread:$0]  %s24, 384, %s26, [#allocation3]
    $region5: #{tpu_custom_call.1} parent=1 // pred_fallthru
      _
    // Predicated region
    $region6: #{tpu_custom_call.1} parent=1 // pred_check
      _
    $region7: #{tpu_custom_call.1} parent=1 // pred_check_branch
      %30 = sbr.rel (0) target = $region9
    $region8: #{tpu_custom_call.1} parent=1 // pred_region
      _
    $region9: #{tpu_custom_call.1} parent=1 // pred_fallthru
      _
    // Predicated region
    $region10: #{tpu_custom_call.1} parent=1 // pred_check
      _
    $region11: #{tpu_custom_call.1} parent=1 // pred_check_branch
      %32 = sbr.rel (0) target = $region13
    $region12: #{tpu_custom_call.1} parent=1 // pred_region
      _
    $region13: #{tpu_custom_call.1} parent=1 // pred_fallthru
      _
    // Predicated region
    $region14: #{tpu_custom_call.1} parent=1 // pred_check
      _
    $region15: #{tpu_custom_call.1} parent=1 // pred_check_branch
      %34 = sbr.rel (0) target = $region17
    $region16: #{tpu_custom_call.1} parent=1 // pred_region
      _
    $region17: #{tpu_custom_call.1} parent=1 // pred_fallthru
      _
    // Predicated region
    $region18: #{tpu_custom_call.1} parent=1 // pred_check
      _
    $region19: #{tpu_custom_call.1} parent=1 // pred_check_branch
      %36 = sbr.rel (0) target = $region21
    $region20: #{tpu_custom_call.1} parent=1 // pred_region
      _
    $region21: #{tpu_custom_call.1} parent=1 // pred_fallthru
      _
    // Predicated region
    $region22: #{tpu_custom_call.1} parent=1 // pred_check
      _
    $region23: #{tpu_custom_call.1} parent=1 // pred_check_branch
      %38 = sbr.rel (0) target = $region25
    $region24: #{tpu_custom_call.1} parent=1 // pred_region
      _
    $region25: #{tpu_custom_call.1} parent=1 // pred_fallthru
      _
    // Predicated region
    $region26: #{tpu_custom_call.1} parent=1 // pred_check
      _
    $region27: #{tpu_custom_call.1} parent=1 // pred_check_branch
      %40 = sbr.rel (0) target = $region29
    $region28: #{tpu_custom_call.1} parent=1 // pred_region
      _
    $region29: #{tpu_custom_call.1} parent=1 // pred_fallthru
      _
    // Predicated region
    $region30: #{tpu_custom_call.1} parent=1 // pred_check
      _
    $region31: #{tpu_custom_call.1} parent=1 // pred_check_branch
      %42 = sbr.rel (0) target = $region33
    $region32: #{tpu_custom_call.1} parent=1 // pred_region
      _
    $region33: #{tpu_custom_call.1} parent=1 // pred_fallthru
      _
    // Predicated region
    $region34: #{tpu_custom_call.1} parent=1 // pred_check
      _
    $region35: #{tpu_custom_call.1} parent=1 // pred_check_branch
      %44 = sbr.rel (0) target = $region37
    $region36: #{tpu_custom_call.1} parent=1 // pred_region
      _
    $region37: #{tpu_custom_call.1} parent=1 // pred_fallthru
      _
    // Predicated region
    $region38: #{tpu_custom_call.1} parent=1 // pred_check
      _
    $region39: #{tpu_custom_call.1} parent=1 // pred_check_branch
      %46 = sbr.rel (0) target = $region41
    $region40: #{tpu_custom_call.1} parent=1 // pred_region
      _
    $region41: #{tpu_custom_call.1} parent=1 // pred_fallthru
      _
    // Predicated region
    $region42: #{tpu_custom_call.1} parent=1 // pred_check
      _
    $region43: #{tpu_custom_call.1} parent=1 // pred_check_branch
      %48 = sbr.rel (0) target = $region45
    $region44: #{tpu_custom_call.1} parent=1 // pred_region
      _
    $region45: #{tpu_custom_call.1} parent=1 // pred_fallthru
      _
    // Predicated region
    $region46: #{tpu_custom_call.1} parent=1 // pred_check
      _
    $region47: #{tpu_custom_call.1} parent=1 // pred_check_branch
      %50 = sbr.rel (0) target = $region49
    $region48: #{tpu_custom_call.1} parent=1 // pred_region
      %52 = dma.done [#allocation3], 384
    $region49: #{tpu_custom_call.1} parent=1 // pred_fallthru
      _
    %v53 = vld [vmem:[#allocation2] sm:$0xff]
    %v54 = vld [vmem:[#allocation2 + $0x8] sm:$0xff]
    %v55 = vld [vmem:[#allocation2 + $0x10] sm:$0xff]
    %v56 = vld [vmem:[%s1] sm:$0x3f]
    %v57 = vld [vmem:[%s2] sm:$0xf]
    %61 = vst [vmem:[#allocation1] ss:$2 sm:$0xff] %v53
    %s62 = scalar_lea.vmem [#allocation1], 16
    %63 = vst [vmem:[%s62] ss:$2 sm:$0xff] %v54
    %s64 = scalar_lea.vmem [#allocation1], 32
    %65 = vst [vmem:[%s64] ss:$2 sm:$0xff] %v55
    %v66 = vld.sshfl [vmem:[#allocation1] sm:$0xff pattern:$0x75316420]
    %v67 = vld.sshfl [vmem:[#allocation1 + $0x8] sm:$0xff pattern:$0x75316420]
    %v68 = vld.sshfl [vmem:[#allocation1 + $0x10] sm:$0xff pattern:$0x75316420]
    %v69 = vld.sshfl [vmem:[#allocation1 + $0x18] sm:$0xff pattern:$0x75316420]
    %v70 = vld.sshfl [vmem:[#allocation1 + $0x20] sm:$0xff pattern:$0x75316420]
    %v71 = vld.sshfl [vmem:[#allocation1 + $0x28] sm:$0xff pattern:$0x75316420]
    %72 = vrot.lane.b32.xlu0 %v66, 19
    %v73 = vpop.permute.xlu0 %72
    %74 = vrot.lane.b32.xlu0 %v67, 19
    %v75 = vpop.permute.xlu0 %74
    %76 = vrot.lane.b32.xlu0 %v68, 19
    %v77 = vpop.permute.xlu0 %76
    %78 = vrot.lane.b32.xlu0 %v69, 19
    %v79 = vpop.permute.xlu0 %78
    %80 = vrot.lane.b32.xlu0 %v70, 19
    %v81 = vpop.permute.xlu0 %80
    %82 = vrot.lane.b32.xlu0 %v71, 19
    %v83 = vpop.permute.xlu0 %82
    %vm84 = vcmask 154624
    %v85 = vsel %vm84, %v73, %v75
    %v86 = vsel %vm84, %v75, %v77
    %v87 = vsel %vm84, %v77, %v79
    %v88 = vsel %vm84, %v79, %v81
    %v89 = vsel %vm84, %v81, %v83
    %v96 = vsel %vm84, 0.0, %v73
    %vm97 = vcmask 220160
    %v98 = vsel %vm97, %v89, 0.0
    %v101 = vrot.slane %v96, 4
    %v102 = vrot.slane %v85, 4
    %v103 = vrot.slane %v86, 4
    %v104 = vrot.slane %v87, 4
    %v105 = vrot.slane %v88, 4
    %v106 = vrot.slane %v98, 4
    %107 = vrot.lane.b32.xlu0 %v101, 127
    %v108 = vpop.permute.xlu0 %107
    %109 = vrot.lane.b32.xlu0 %v102, 127
    %v110 = vpop.permute.xlu0 %109
    %111 = vrot.lane.b32.xlu0 %v103, 127
    %v112 = vpop.permute.xlu0 %111
    %113 = vrot.lane.b32.xlu0 %v104, 127
    %v114 = vpop.permute.xlu0 %113
    %115 = vrot.lane.b32.xlu0 %v105, 127
    %v116 = vpop.permute.xlu0 %115
    %117 = vrot.lane.b32.xlu0 %v106, 127
    %v118 = vpop.permute.xlu0 %117
    %vm119 = vcmask 1039360
    %v120 = vsel %vm119, %v108, %v110
    %v121 = vsel %vm119, %v110, %v112
    %v122 = vsel %vm119, %v112, %v114
    %v123 = vsel %vm119, %v114, %v116
    %v124 = vsel %vm119, %v116, %v118
    %131 = vrot.lane.b32.xlu0 %v96, 126
    %v132 = vpop.permute.xlu0 %131
    %133 = vrot.lane.b32.xlu0 %v85, 126
    %v134 = vpop.permute.xlu0 %133
    %135 = vrot.lane.b32.xlu0 %v86, 126
    %v136 = vpop.permute.xlu0 %135
    %137 = vrot.lane.b32.xlu0 %v87, 126
    %v138 = vpop.permute.xlu0 %137
    %139 = vrot.lane.b32.xlu0 %v88, 126
    %v140 = vpop.permute.xlu0 %139
    %141 = vrot.lane.b32.xlu0 %v98, 126
    %v142 = vpop.permute.xlu0 %141
    %vm143 = vcmask 1031168
    %v144 = vsel %vm143, %v132, %v134
    %v145 = vsel %vm143, %v134, %v136
    %v146 = vsel %vm143, %v136, %v138
    %v147 = vsel %vm143, %v138, %v140
    %v148 = vsel %vm143, %v140, %v142
    %155 = vrot.lane.b32.xlu0 %v101, 110
    %v156 = vpop.permute.xlu0 %155
    %157 = vrot.lane.b32.xlu0 %v102, 110
    %v158 = vpop.permute.xlu0 %157
    %159 = vrot.lane.b32.xlu0 %v103, 110
    %v160 = vpop.permute.xlu0 %159
    %161 = vrot.lane.b32.xlu0 %v104, 110
    %v162 = vpop.permute.xlu0 %161
    %163 = vrot.lane.b32.xlu0 %v105, 110
    %v164 = vpop.permute.xlu0 %163
    %165 = vrot.lane.b32.xlu0 %v106, 110
    %v166 = vpop.permute.xlu0 %165
    %vm167 = vcmask 900096
    %v168 = vsel %vm167, %v156, %v158
    %v169 = vsel %vm167, %v158, %v160
    %v170 = vsel %vm167, %v160, %v162
    %v171 = vsel %vm167, %v162, %v164
    %v172 = vsel %vm167, %v164, %v166
    %179 = vrot.lane.b32.xlu0 %v96, 109
    %v180 = vpop.permute.xlu0 %179
    %181 = vrot.lane.b32.xlu0 %v85, 109
    %v182 = vpop.permute.xlu0 %181
    %183 = vrot.lane.b32.xlu0 %v86, 109
    %v184 = vpop.permute.xlu0 %183
    %185 = vrot.lane.b32.xlu0 %v87, 109
    %v186 = vpop.permute.xlu0 %185
    %187 = vrot.lane.b32.xlu0 %v88, 109
    %v188 = vpop.permute.xlu0 %187
    %189 = vrot.lane.b32.xlu0 %v98, 109
    %v190 = vpop.permute.xlu0 %189
    %vm191 = vcmask 891904
    %v192 = vsel %vm191, %v180, %v182
    %v193 = vsel %vm191, %v182, %v184
    %v194 = vsel %vm191, %v184, %v186
    %v195 = vsel %vm191, %v186, %v188
    %v196 = vsel %vm191, %v188, %v190
    %203 = vrot.lane.b32.xlu0 %v101, 108
    %v204 = vpop.permute.xlu0 %203
    %205 = vrot.lane.b32.xlu0 %v102, 108
    %v206 = vpop.permute.xlu0 %205
    %207 = vrot.lane.b32.xlu0 %v103, 108
    %v208 = vpop.permute.xlu0 %207
    %209 = vrot.lane.b32.xlu0 %v104, 108
    %v210 = vpop.permute.xlu0 %209
    %211 = vrot.lane.b32.xlu0 %v105, 108
    %v212 = vpop.permute.xlu0 %211
    %213 = vrot.lane.b32.xlu0 %v106, 108
    %v214 = vpop.permute.xlu0 %213
    %vm215 = vcmask 883712
    %v216 = vsel %vm215, %v204, %v206
    %v217 = vsel %vm215, %v206, %v208
    %v218 = vsel %vm215, %v208, %v210
    %v219 = vsel %vm215, %v210, %v212
    %v220 = vsel %vm215, %v212, %v214
    %227 = vrot.lane.b32.xlu0 %v96, 92
    %v228 = vpop.permute.xlu0 %227
    %229 = vrot.lane.b32.xlu0 %v85, 92
    %v230 = vpop.permute.xlu0 %229
    %231 = vrot.lane.b32.xlu0 %v86, 92
    %v232 = vpop.permute.xlu0 %231
    %233 = vrot.lane.b32.xlu0 %v87, 92
    %v234 = vpop.permute.xlu0 %233
    %235 = vrot.lane.b32.xlu0 %v88, 92
    %v236 = vpop.permute.xlu0 %235
    %237 = vrot.lane.b32.xlu0 %v98, 92
    %v238 = vpop.permute.xlu0 %237
    %vm239 = vcmask 752640
    %v240 = vsel %vm239, %v228, %v230
    %v241 = vsel %vm239, %v230, %v232
    %v242 = vsel %vm239, %v232, %v234
    %v243 = vsel %vm239, %v234, %v236
    %v244 = vsel %vm239, %v236, %v238
    %251 = vrot.lane.b32.xlu0 %v101, 91
    %v252 = vpop.permute.xlu0 %251
    %253 = vrot.lane.b32.xlu0 %v102, 91
    %v254 = vpop.permute.xlu0 %253
    %255 = vrot.lane.b32.xlu0 %v103, 91
    %v256 = vpop.permute.xlu0 %255
    %257 = vrot.lane.b32.xlu0 %v104, 91
    %v258 = vpop.permute.xlu0 %257
    %259 = vrot.lane.b32.xlu0 %v105, 91
    %v260 = vpop.permute.xlu0 %259
    %261 = vrot.lane.b32.xlu0 %v106, 91
    %v262 = vpop.permute.xlu0 %261
    %vm263 = vcmask 744448
    %v264 = vsel %vm263, %v252, %v254
    %v265 = vsel %vm263, %v254, %v256
    %v266 = vsel %vm263, %v256, %v258
    %v267 = vsel %vm263, %v258, %v260
    %v268 = vsel %vm263, %v260, %v262
    %275 = vrot.lane.b32.xlu0 %v96, 90
    %v276 = vpop.permute.xlu0 %275
    %277 = vrot.lane.b32.xlu0 %v85, 90
    %v278 = vpop.permute.xlu0 %277
    %279 = vrot.lane.b32.xlu0 %v86, 90
    %v280 = vpop.permute.xlu0 %279
    %281 = vrot.lane.b32.xlu0 %v87, 90
    %v282 = vpop.permute.xlu0 %281
    %283 = vrot.lane.b32.xlu0 %v88, 90
    %v284 = vpop.permute.xlu0 %283
    %285 = vrot.lane.b32.xlu0 %v98, 90
    %v286 = vpop.permute.xlu0 %285
    %vm287 = vcmask 736256
    %v288 = vsel %vm287, %v276, %v278
    %v289 = vsel %vm287, %v278, %v280
    %v290 = vsel %vm287, %v280, %v282
    %v291 = vsel %vm287, %v282, %v284
    %v292 = vsel %vm287, %v284, %v286
    %vm293 = vcmask 1043456
    %v294 = vsel %vm293, %v96, %v120
    %v295 = vsel %vm293, %v85, %v121
    %v296 = vsel %vm293, %v86, %v122
    %v297 = vsel %vm293, %v87, %v123
    %v298 = vsel %vm293, %v88, %v124
    %v299 = vsel %vm293, %v98, %v118
    %v300 = vsel %vm293, %v144, %v168
    %v301 = vsel %vm293, %v145, %v169
    %v302 = vsel %vm293, %v146, %v170
    %v303 = vsel %vm293, %v147, %v171
    %v304 = vsel %vm293, %v148, %v172
    %v305 = vsel %vm293, %v142, %v166
    %v306 = vsel %vm293, %v192, %v216
    %v307 = vsel %vm293, %v193, %v217
    %v308 = vsel %vm293, %v194, %v218
    %v309 = vsel %vm293, %v195, %v219
    %v310 = vsel %vm293, %v196, %v220
    %v311 = vsel %vm293, %v190, %v214
    %v312 = vsel %vm293, %v240, %v264
    %v313 = vsel %vm293, %v241, %v265
    %v314 = vsel %vm293, %v242, %v266
    %v315 = vsel %vm293, %v243, %v267
    %v316 = vsel %vm293, %v244, %v268
    %v317 = vsel %vm293, %v238, %v262
    %vm318 = vcmask 293888
    %v320 = vsel %vm318, %v57, 0
    %v322 = vsel %vm293, %v288, 0
    %v324 = vsel %vm293, %v289, 0
    %v326 = vsel %vm293, %v290, 0
    %v328 = vsel %vm293, %v291, 0
    %v330 = vsel %vm293, %v292, 0
    %v332 = vsel %vm293, %v286, 0
    %334 = vmatpush.msra.mxu0 0.0
    %335 = vmatpush.msra.mxu0 0.0
    %336 = vmatpush.msra.mxu0 0.0
    %337 = vmatpush.msra.mxu0 0.0
    %338 = vmatpush.msra.mxu0 0.0
    %339 = vmatpush.msra.mxu0 0.0
    %340 = vmatpush.msra.mxu0 0.0
    %341 = vmatpush.msra.mxu0 0.0
    %342 = vmatpush.msra.mxu0 0.0
    %343 = vmatpush.msra.mxu0 0.0
    %344 = vmatpush.msra.mxu0 0.0
    %345 = vmatpush.msra.mxu0 %v322
    %346 = vmatpush.msra.mxu0 %v312
    %347 = vmatpush.msra.mxu0 %v306
    %348 = vmatpush.msra.mxu0 %v300
    %349 = vmatpush.msra.mxu0 %v294
    %350 = vmatmul.f32.gmra.mxu0 %v320
    %v351 = vpop.f32.mrf.mxu0
    %v352 = vadd.f32 0.0, %v351
    %353 = vdwg.mxu0
    %354 = vmatpush.msra.mxu0 0.0
    %355 = vmatpush.msra.mxu0 0.0
    %356 = vmatpush.msra.mxu0 0.0
    %357 = vmatpush.msra.mxu0 0.0
    %358 = vmatpush.msra.mxu0 0.0
    %359 = vmatpush.msra.mxu0 0.0
    %360 = vmatpush.msra.mxu0 0.0
    %361 = vmatpush.msra.mxu0 0.0
    %362 = vmatpush.msra.mxu0 0.0
    %363 = vmatpush.msra.mxu0 0.0
    %364 = vmatpush.msra.mxu0 0.0
    %365 = vmatpush.msra.mxu0 %v324
    %366 = vmatpush.msra.mxu0 %v313
    %367 = vmatpush.msra.mxu0 %v307
    %368 = vmatpush.msra.mxu0 %v301
    %369 = vmatpush.msra.mxu0 %v295
    %370 = vmatmul.f32.gmra.mxu0 %v320
    %v371 = vpop.f32.mrf.mxu0
    %v372 = vadd.f32 0.0, %v371
    %373 = vdwg.mxu0
    %374 = vmatpush.msra.mxu0 0.0
    %375 = vmatpush.msra.mxu0 0.0
    %376 = vmatpush.msra.mxu0 0.0
    %377 = vmatpush.msra.mxu0 0.0
    %378 = vmatpush.msra.mxu0 0.0
    %379 = vmatpush.msra.mxu0 0.0
    %380 = vmatpush.msra.mxu0 0.0
    %381 = vmatpush.msra.mxu0 0.0
    %382 = vmatpush.msra.mxu0 0.0
    %383 = vmatpush.msra.mxu0 0.0
    %384 = vmatpush.msra.mxu0 0.0
    %385 = vmatpush.msra.mxu0 %v326
    %386 = vmatpush.msra.mxu0 %v314
    %387 = vmatpush.msra.mxu0 %v308
    %388 = vmatpush.msra.mxu0 %v302
    %389 = vmatpush.msra.mxu0 %v296
    %390 = vmatmul.f32.gmra.mxu0 %v320
    %v391 = vpop.f32.mrf.mxu0
    %v392 = vadd.f32 0.0, %v391
    %393 = vdwg.mxu0
    %394 = vmatpush.msra.mxu0 0.0
    %395 = vmatpush.msra.mxu0 0.0
    %396 = vmatpush.msra.mxu0 0.0
    %397 = vmatpush.msra.mxu0 0.0
    %398 = vmatpush.msra.mxu0 0.0
    %399 = vmatpush.msra.mxu0 0.0
    %400 = vmatpush.msra.mxu0 0.0
    %401 = vmatpush.msra.mxu0 0.0
    %402 = vmatpush.msra.mxu0 0.0
    %403 = vmatpush.msra.mxu0 0.0
    %404 = vmatpush.msra.mxu0 0.0
    %405 = vmatpush.msra.mxu0 %v328
    %406 = vmatpush.msra.mxu0 %v315
    %407 = vmatpush.msra.mxu0 %v309
    %408 = vmatpush.msra.mxu0 %v303
    %409 = vmatpush.msra.mxu0 %v297
    %410 = vmatmul.f32.gmra.mxu0 %v320
    %v411 = vpop.f32.mrf.mxu0
    %v412 = vadd.f32 0.0, %v411
    %413 = vdwg.mxu0
    %414 = vmatpush.msra.mxu0 0.0
    %415 = vmatpush.msra.mxu0 0.0
    %416 = vmatpush.msra.mxu0 0.0
    %417 = vmatpush.msra.mxu0 0.0
    %418 = vmatpush.msra.mxu0 0.0
    %419 = vmatpush.msra.mxu0 0.0
    %420 = vmatpush.msra.mxu0 0.0
    %421 = vmatpush.msra.mxu0 0.0
    %422 = vmatpush.msra.mxu0 0.0
    %423 = vmatpush.msra.mxu0 0.0
    %424 = vmatpush.msra.mxu0 0.0
    %425 = vmatpush.msra.mxu0 %v330
    %426 = vmatpush.msra.mxu0 %v316
    %427 = vmatpush.msra.mxu0 %v310
    %428 = vmatpush.msra.mxu0 %v304
    %429 = vmatpush.msra.mxu0 %v298
    %430 = vmatmul.f32.gmra.mxu0 %v320
    %v431 = vpop.f32.mrf.mxu0
    %v432 = vadd.f32 0.0, %v431
    %433 = vdwg.mxu0
    %434 = vmatpush.msra.mxu0 0.0
    %435 = vmatpush.msra.mxu0 0.0
    %436 = vmatpush.msra.mxu0 0.0
    %437 = vmatpush.msra.mxu0 0.0
    %438 = vmatpush.msra.mxu0 0.0
    %439 = vmatpush.msra.mxu0 0.0
    %440 = vmatpush.msra.mxu0 0.0
    %441 = vmatpush.msra.mxu0 0.0
    %442 = vmatpush.msra.mxu0 0.0
    %443 = vmatpush.msra.mxu0 0.0
    %444 = vmatpush.msra.mxu0 0.0
    %445 = vmatpush.msra.mxu0 %v332
    %446 = vmatpush.msra.mxu0 %v317
    %447 = vmatpush.msra.mxu0 %v311
    %448 = vmatpush.msra.mxu0 %v305
    %449 = vmatpush.msra.mxu0 %v299
    %450 = vmatmul.f32.gmra.mxu0 %v320
    %v451 = vpop.f32.mrf.mxu0
    %v452 = vadd.f32 0.0, %v451
    %453 = vdwg.mxu0
    %v454 = vld [vmem:[%s5] sm:$0xf]
    %v455 = vld [vmem:[%s6] sm:$0xf]
    %v457 = vperm.slane %v56, 0
    %v458 = vperm.slane %v56, 1
    %v459 = vperm.slane %v56, 2
    %v460 = vperm.slane %v56, 3
    %v461 = vperm.slane %v56, 4
    %v462 = vperm.slane %v56, 5
    %v469 = vmul.f32 %v352, %v457
    %v470 = vmul.f32 %v372, %v458
    %v471 = vmul.f32 %v392, %v459
    %v472 = vmul.f32 %v412, %v460
    %v473 = vmul.f32 %v432, %v461
    %v474 = vmul.f32 %v452, %v462
    %v475 = vsel %vm293, %v469, 0.0
    %v476 = vsel %vm293, %v470, 0.0
    %v477 = vadd.f32 %v475, %v476
    %v478 = vsel %vm293, %v471, 0.0
    %v479 = vadd.f32 %v477, %v478
    %v480 = vsel %vm293, %v472, 0.0
    %v481 = vadd.f32 %v479, %v480
    %v482 = vsel %vm293, %v473, 0.0
    %v483 = vadd.f32 %v481, %v482
    %vm484 = vcmask 60416
    %v485 = vsel %vm484, %v474, 0.0
    %v486 = vadd.f32 %v483, %v485
    %487 = vadd.xlane.f32.xlu0 %v486
    %v488 = vpop.xlane.xlu0 %487
    %v489 = vrcp.pop 512.0
    %v490 = vmul.f32 512.0, %v489
    %v491 = vsub.f32 1.0, %v490
    %v492 = vmul.f32 %v489, %v491
    %v493 = vadd.f32 %v489, %v492
    %vm494 = vweird.f32 %v489
    %v495 = vsel %vm494, %v489, %v493
    %v496 = vmul.f32 %v488, %v495
    %v497 = vsub.f32 %v352, %v496
    %v498 = vsub.f32 %v372, %v496
    %v499 = vsub.f32 %v392, %v496
    %v500 = vsub.f32 %v412, %v496
    %v501 = vsub.f32 %v432, %v496
    %v502 = vsub.f32 %v452, %v496
    %v503 = vmul.f32 %v497, %v497
    %v504 = vmul.f32 %v498, %v498
    %v505 = vmul.f32 %v499, %v499
    %v506 = vmul.f32 %v500, %v500
    %v507 = vmul.f32 %v501, %v501
    %v508 = vmul.f32 %v502, %v502
    %v509 = vmul.f32 %v503, %v457
    %v510 = vmul.f32 %v504, %v458
    %v511 = vmul.f32 %v505, %v459
    %v512 = vmul.f32 %v506, %v460
    %v513 = vmul.f32 %v507, %v461
    %v514 = vmul.f32 %v508, %v462
    %v515 = vsel %vm293, %v509, 0.0
    %v516 = vsel %vm293, %v510, 0.0
    %v517 = vadd.f32 %v515, %v516
    %v518 = vsel %vm293, %v511, 0.0
    %v519 = vadd.f32 %v517, %v518
    %v520 = vsel %vm293, %v512, 0.0
    %v521 = vadd.f32 %v519, %v520
    %v522 = vsel %vm293, %v513, 0.0
    %v523 = vadd.f32 %v521, %v522
    %v524 = vsel %vm484, %v514, 0.0
    %v525 = vadd.f32 %v523, %v524
    %526 = vadd.xlane.f32.xlu0 %v525
    %v527 = vpop.xlane.xlu0 %526
    %v528 = vmul.f32 %v527, %v495
    %v529 = vadd.f32 %v528, 1e-05
    %v530 = vrsqrt.pop %v529
    %v531 = vmul.f32 %v530, %v529
    %v532 = vmul.f32 %v531, %v530
    %v533 = vmul.f32 0.5, %v532
    %v534 = vsub.f32 1.5, %v533
    %v535 = vmul.f32 %v530, %v534
    %vm536 = vweird.f32 %v529
    %vm537 = vweird.f32 %v530
    %vm538 = vmor %vm536, %vm537
    %v539 = vsel %vm538, %v530, %v535
    %v540 = vmul.f32 %v497, %v539
    %v541 = vmul.f32 %v498, %v539
    %v542 = vmul.f32 %v499, %v539
    %v543 = vmul.f32 %v500, %v539
    %v544 = vmul.f32 %v501, %v539
    %v545 = vmul.f32 %v502, %v539
    %547 = vset.pattern.permute.xlu0 0
    %548 = vperm.xlu0 %547, %v454
    %v549 = vpop.permute.xlu0 %548
    %v551 = vmul.f32 %v540, %v549
    %v552 = vmul.f32 %v541, %v549
    %v553 = vmul.f32 %v542, %v549
    %v554 = vmul.f32 %v543, %v549
    %v555 = vmul.f32 %v544, %v549
    %v556 = vmul.f32 %v545, %v549
    %558 = vset.pattern.permute.xlu0 0
    %559 = vperm.xlu0 %558, %v455
    %v560 = vpop.permute.xlu0 %559
    %v562 = vadd.f32 %v551, %v560
    %v563 = vadd.f32 %v552, %v560
    %v564 = vadd.f32 %v553, %v560
    %v565 = vadd.f32 %v554, %v560
    %v566 = vadd.f32 %v555, %v560
    %v567 = vadd.f32 %v556, %v560
    %vm568 = vcmp.gt.f32.partialorder %v562, 0.0
    %vm569 = vcmp.gt.f32.partialorder %v563, 0.0
    %vm570 = vcmp.gt.f32.partialorder %v564, 0.0
    %vm571 = vcmp.gt.f32.partialorder %v565, 0.0
    %vm572 = vcmp.gt.f32.partialorder %v566, 0.0
    %vm573 = vcmp.gt.f32.partialorder %v567, 0.0
    %v574 = vmul.f32 %v562, 0.2
    %v575 = vmul.f32 %v563, 0.2
    %v576 = vmul.f32 %v564, 0.2
    %v577 = vmul.f32 %v565, 0.2
    %v578 = vmul.f32 %v566, 0.2
    %v579 = vmul.f32 %v567, 0.2
    %v580 = vsel %vm568, %v562, %v574
    %v581 = vsel %vm569, %v563, %v575
    %v582 = vsel %vm570, %v564, %v576
    %v583 = vsel %vm571, %v565, %v577
    %v584 = vsel %vm572, %v566, %v578
    %v585 = vsel %vm573, %v567, %v579
    %v586 = vmul.f32 %v580, %v457
    %v587 = vmul.f32 %v581, %v458
    %v588 = vmul.f32 %v582, %v459
    %v589 = vmul.f32 %v583, %v460
    %v590 = vmul.f32 %v584, %v461
    %v591 = vmul.f32 %v585, %v462
    %v592 = vld [vmem:[%s3] sm:$0xff]
    %599 = vrot.lane.b32.xlu0 %v586, 19
    %v600 = vpop.permute.xlu0 %599
    %601 = vrot.lane.b32.xlu0 %v587, 19
    %v602 = vpop.permute.xlu0 %601
    %603 = vrot.lane.b32.xlu0 %v588, 19
    %v604 = vpop.permute.xlu0 %603
    %605 = vrot.lane.b32.xlu0 %v589, 19
    %v606 = vpop.permute.xlu0 %605
    %607 = vrot.lane.b32.xlu0 %v590, 19
    %v608 = vpop.permute.xlu0 %607
    %609 = vrot.lane.b32.xlu0 %v591, 19
    %v610 = vpop.permute.xlu0 %609
    %v611 = vsel %vm84, %v600, %v602
    %v612 = vsel %vm84, %v602, %v604
    %v613 = vsel %vm84, %v604, %v606
    %v614 = vsel %vm84, %v606, %v608
    %v615 = vsel %vm84, %v608, %v610
    %v622 = vsel %vm84, 0.0, %v600
    %v623 = vsel %vm97, %v615, 0.0
    %v626 = vrot.slane %v622, 4
    %v627 = vrot.slane %v611, 4
    %v628 = vrot.slane %v612, 4
    %v629 = vrot.slane %v613, 4
    %v630 = vrot.slane %v614, 4
    %v631 = vrot.slane %v623, 4
    %632 = vrot.lane.b32.xlu0 %v626, 127
    %v633 = vpop.permute.xlu0 %632
    %634 = vrot.lane.b32.xlu0 %v627, 127
    %v635 = vpop.permute.xlu0 %634
    %636 = vrot.lane.b32.xlu0 %v628, 127
    %v637 = vpop.permute.xlu0 %636
    %638 = vrot.lane.b32.xlu0 %v629, 127
    %v639 = vpop.permute.xlu0 %638
    %640 = vrot.lane.b32.xlu0 %v630, 127
    %v641 = vpop.permute.xlu0 %640
    %642 = vrot.lane.b32.xlu0 %v631, 127
    %v643 = vpop.permute.xlu0 %642
    %v644 = vsel %vm119, %v633, %v635
    %v645 = vsel %vm119, %v635, %v637
    %v646 = vsel %vm119, %v637, %v639
    %v647 = vsel %vm119, %v639, %v641
    %v648 = vsel %vm119, %v641, %v643
    %655 = vrot.lane.b32.xlu0 %v622, 126
    %v656 = vpop.permute.xlu0 %655
    %657 = vrot.lane.b32.xlu0 %v611, 126
    %v658 = vpop.permute.xlu0 %657
    %659 = vrot.lane.b32.xlu0 %v612, 126
    %v660 = vpop.permute.xlu0 %659
    %661 = vrot.lane.b32.xlu0 %v613, 126
    %v662 = vpop.permute.xlu0 %661
    %663 = vrot.lane.b32.xlu0 %v614, 126
    %v664 = vpop.permute.xlu0 %663
    %665 = vrot.lane.b32.xlu0 %v623, 126
    %v666 = vpop.permute.xlu0 %665
    %v667 = vsel %vm143, %v656, %v658
    %v668 = vsel %vm143, %v658, %v660
    %v669 = vsel %vm143, %v660, %v662
    %v670 = vsel %vm143, %v662, %v664
    %v671 = vsel %vm143, %v664, %v666
    %678 = vrot.lane.b32.xlu0 %v626, 110
    %v679 = vpop.permute.xlu0 %678
    %680 = vrot.lane.b32.xlu0 %v627, 110
    %v681 = vpop.permute.xlu0 %680
    %682 = vrot.lane.b32.xlu0 %v628, 110
    %v683 = vpop.permute.xlu0 %682
    %684 = vrot.lane.b32.xlu0 %v629, 110
    %v685 = vpop.permute.xlu0 %684
    %686 = vrot.lane.b32.xlu0 %v630, 110
    %v687 = vpop.permute.xlu0 %686
    %688 = vrot.lane.b32.xlu0 %v631, 110
    %v689 = vpop.permute.xlu0 %688
    %v690 = vsel %vm167, %v679, %v681
    %v691 = vsel %vm167, %v681, %v683
    %v692 = vsel %vm167, %v683, %v685
    %v693 = vsel %vm167, %v685, %v687
    %v694 = vsel %vm167, %v687, %v689
    %701 = vrot.lane.b32.xlu0 %v622, 109
    %v702 = vpop.permute.xlu0 %701
    %703 = vrot.lane.b32.xlu0 %v611, 109
    %v704 = vpop.permute.xlu0 %703
    %705 = vrot.lane.b32.xlu0 %v612, 109
    %v706 = vpop.permute.xlu0 %705
    %707 = vrot.lane.b32.xlu0 %v613, 109
    %v708 = vpop.permute.xlu0 %707
    %709 = vrot.lane.b32.xlu0 %v614, 109
    %v710 = vpop.permute.xlu0 %709
    %711 = vrot.lane.b32.xlu0 %v623, 109
    %v712 = vpop.permute.xlu0 %711
    %v713 = vsel %vm191, %v702, %v704
    %v714 = vsel %vm191, %v704, %v706
    %v715 = vsel %vm191, %v706, %v708
    %v716 = vsel %vm191, %v708, %v710
    %v717 = vsel %vm191, %v710, %v712
    %724 = vrot.lane.b32.xlu0 %v626, 108
    %v725 = vpop.permute.xlu0 %724
    %726 = vrot.lane.b32.xlu0 %v627, 108
    %v727 = vpop.permute.xlu0 %726
    %728 = vrot.lane.b32.xlu0 %v628, 108
    %v729 = vpop.permute.xlu0 %728
    %730 = vrot.lane.b32.xlu0 %v629, 108
    %v731 = vpop.permute.xlu0 %730
    %732 = vrot.lane.b32.xlu0 %v630, 108
    %v733 = vpop.permute.xlu0 %732
    %734 = vrot.lane.b32.xlu0 %v631, 108
    %v735 = vpop.permute.xlu0 %734
    %v736 = vsel %vm215, %v725, %v727
    %v737 = vsel %vm215, %v727, %v729
    %v738 = vsel %vm215, %v729, %v731
    %v739 = vsel %vm215, %v731, %v733
    %v740 = vsel %vm215, %v733, %v735
    %747 = vrot.lane.b32.xlu0 %v622, 92
    %v748 = vpop.permute.xlu0 %747
    %749 = vrot.lane.b32.xlu0 %v611, 92
    %v750 = vpop.permute.xlu0 %749
    %751 = vrot.lane.b32.xlu0 %v612, 92
    %v752 = vpop.permute.xlu0 %751
    %753 = vrot.lane.b32.xlu0 %v613, 92
    %v754 = vpop.permute.xlu0 %753
    %755 = vrot.lane.b32.xlu0 %v614, 92
    %v756 = vpop.permute.xlu0 %755
    %757 = vrot.lane.b32.xlu0 %v623, 92
    %v758 = vpop.permute.xlu0 %757
    %v759 = vsel %vm239, %v748, %v750
    %v760 = vsel %vm239, %v750, %v752
    %v761 = vsel %vm239, %v752, %v754
    %v762 = vsel %vm239, %v754, %v756
    %v763 = vsel %vm239, %v756, %v758
    %770 = vrot.lane.b32.xlu0 %v626, 91
    %v771 = vpop.permute.xlu0 %770
    %772 = vrot.lane.b32.xlu0 %v627, 91
    %v773 = vpop.permute.xlu0 %772
    %774 = vrot.lane.b32.xlu0 %v628, 91
    %v775 = vpop.permute.xlu0 %774
    %776 = vrot.lane.b32.xlu0 %v629, 91
    %v777 = vpop.permute.xlu0 %776
    %778 = vrot.lane.b32.xlu0 %v630, 91
    %v779 = vpop.permute.xlu0 %778
    %780 = vrot.lane.b32.xlu0 %v631, 91
    %v781 = vpop.permute.xlu0 %780
    %v782 = vsel %vm263, %v771, %v773
    %v783 = vsel %vm263, %v773, %v775
    %v784 = vsel %vm263, %v775, %v777
    %v785 = vsel %vm263, %v777, %v779
    %v786 = vsel %vm263, %v779, %v781
    %793 = vrot.lane.b32.xlu0 %v622, 90
    %v794 = vpop.permute.xlu0 %793
    %795 = vrot.lane.b32.xlu0 %v611, 90
    %v796 = vpop.permute.xlu0 %795
    %797 = vrot.lane.b32.xlu0 %v612, 90
    %v798 = vpop.permute.xlu0 %797
    %799 = vrot.lane.b32.xlu0 %v613, 90
    %v800 = vpop.permute.xlu0 %799
    %801 = vrot.lane.b32.xlu0 %v614, 90
    %v802 = vpop.permute.xlu0 %801
    %803 = vrot.lane.b32.xlu0 %v623, 90
    %v804 = vpop.permute.xlu0 %803
    %v805 = vsel %vm287, %v794, %v796
    %v806 = vsel %vm287, %v796, %v798
    %v807 = vsel %vm287, %v798, %v800
    %v808 = vsel %vm287, %v800, %v802
    %v809 = vsel %vm287, %v802, %v804
    %v810 = vsel %vm293, %v622, %v644
    %v811 = vsel %vm293, %v611, %v645
    %v812 = vsel %vm293, %v612, %v646
    %v813 = vsel %vm293, %v613, %v647
    %v814 = vsel %vm293, %v614, %v648
    %v815 = vsel %vm293, %v623, %v643
    %v816 = vsel %vm293, %v667, %v690
    %v817 = vsel %vm293, %v668, %v691
    %v818 = vsel %vm293, %v669, %v692
    %v819 = vsel %vm293, %v670, %v693
    %v820 = vsel %vm293, %v671, %v694
    %v821 = vsel %vm293, %v666, %v689
    %v822 = vsel %vm293, %v713, %v736
    %v823 = vsel %vm293, %v714, %v737
    %v824 = vsel %vm293, %v715, %v738
    %v825 = vsel %vm293, %v716, %v739
    %v826 = vsel %vm293, %v717, %v740
    %v827 = vsel %vm293, %v712, %v735
    %v828 = vsel %vm293, %v759, %v782
    %v829 = vsel %vm293, %v760, %v783
    %v830 = vsel %vm293, %v761, %v784
    %v831 = vsel %vm293, %v762, %v785
    %v832 = vsel %vm293, %v763, %v786
    %v833 = vsel %vm293, %v758, %v781
    %v835 = vsel %vm318, %v592, 0
    %v837 = vsel %vm293, %v805, 0
    %v839 = vsel %vm293, %v806, 0
    %v841 = vsel %vm293, %v807, 0
    %v843 = vsel %vm293, %v808, 0
    %v845 = vsel %vm293, %v809, 0
    %v847 = vsel %vm293, %v804, 0
    %849 = vmatpush.msra.mxu0 0.0
    %850 = vmatpush.msra.mxu0 0.0
    %851 = vmatpush.msra.mxu0 0.0
    %852 = vmatpush.msra.mxu0 0.0
    %853 = vmatpush.msra.mxu0 0.0
    %854 = vmatpush.msra.mxu0 0.0
    %855 = vmatpush.msra.mxu0 0.0
    %856 = vmatpush.msra.mxu0 0.0
    %857 = vmatpush.msra.mxu0 0.0
    %858 = vmatpush.msra.mxu0 0.0
    %859 = vmatpush.msra.mxu0 0.0
    %860 = vmatpush.msra.mxu0 %v837
    %861 = vmatpush.msra.mxu0 %v828
    %862 = vmatpush.msra.mxu0 %v822
    %863 = vmatpush.msra.mxu0 %v816
    %864 = vmatpush.msra.mxu0 %v810
    %865 = vmatmul.f32.gmra.mxu0 %v835
    %v866 = vpop.f32.mrf.mxu0
    %v867 = vadd.f32 0.0, %v866
    %868 = vdwg.mxu0
    %869 = vmatpush.msra.mxu0 0.0
    %870 = vmatpush.msra.mxu0 0.0
    %871 = vmatpush.msra.mxu0 0.0
    %872 = vmatpush.msra.mxu0 0.0
    %873 = vmatpush.msra.mxu0 0.0
    %874 = vmatpush.msra.mxu0 0.0
    %875 = vmatpush.msra.mxu0 0.0
    %876 = vmatpush.msra.mxu0 0.0
    %877 = vmatpush.msra.mxu0 0.0
    %878 = vmatpush.msra.mxu0 0.0
    %879 = vmatpush.msra.mxu0 0.0
    %880 = vmatpush.msra.mxu0 %v839
    %881 = vmatpush.msra.mxu0 %v829
    %882 = vmatpush.msra.mxu0 %v823
    %883 = vmatpush.msra.mxu0 %v817
    %884 = vmatpush.msra.mxu0 %v811
    %885 = vmatmul.f32.gmra.mxu0 %v835
    %v886 = vpop.f32.mrf.mxu0
    %v887 = vadd.f32 0.0, %v886
    %888 = vdwg.mxu0
    %889 = vmatpush.msra.mxu0 0.0
    %890 = vmatpush.msra.mxu0 0.0
    %891 = vmatpush.msra.mxu0 0.0
    %892 = vmatpush.msra.mxu0 0.0
    %893 = vmatpush.msra.mxu0 0.0
    %894 = vmatpush.msra.mxu0 0.0
    %895 = vmatpush.msra.mxu0 0.0
    %896 = vmatpush.msra.mxu0 0.0
    %897 = vmatpush.msra.mxu0 0.0
    %898 = vmatpush.msra.mxu0 0.0
    %899 = vmatpush.msra.mxu0 0.0
    %900 = vmatpush.msra.mxu0 %v841
    %901 = vmatpush.msra.mxu0 %v830
    %902 = vmatpush.msra.mxu0 %v824
    %903 = vmatpush.msra.mxu0 %v818
    %904 = vmatpush.msra.mxu0 %v812
    %905 = vmatmul.f32.gmra.mxu0 %v835
    %v906 = vpop.f32.mrf.mxu0
    %v907 = vadd.f32 0.0, %v906
    %908 = vdwg.mxu0
    %909 = vmatpush.msra.mxu0 0.0
    %910 = vmatpush.msra.mxu0 0.0
    %911 = vmatpush.msra.mxu0 0.0
    %912 = vmatpush.msra.mxu0 0.0
    %913 = vmatpush.msra.mxu0 0.0
    %914 = vmatpush.msra.mxu0 0.0
    %915 = vmatpush.msra.mxu0 0.0
    %916 = vmatpush.msra.mxu0 0.0
    %917 = vmatpush.msra.mxu0 0.0
    %918 = vmatpush.msra.mxu0 0.0
    %919 = vmatpush.msra.mxu0 0.0
    %920 = vmatpush.msra.mxu0 %v843
    %921 = vmatpush.msra.mxu0 %v831
    %922 = vmatpush.msra.mxu0 %v825
    %923 = vmatpush.msra.mxu0 %v819
    %924 = vmatpush.msra.mxu0 %v813
    %925 = vmatmul.f32.gmra.mxu0 %v835
    %v926 = vpop.f32.mrf.mxu0
    %v927 = vadd.f32 0.0, %v926
    %928 = vdwg.mxu0
    %929 = vmatpush.msra.mxu0 0.0
    %930 = vmatpush.msra.mxu0 0.0
    %931 = vmatpush.msra.mxu0 0.0
    %932 = vmatpush.msra.mxu0 0.0
    %933 = vmatpush.msra.mxu0 0.0
    %934 = vmatpush.msra.mxu0 0.0
    %935 = vmatpush.msra.mxu0 0.0
    %936 = vmatpush.msra.mxu0 0.0
    %937 = vmatpush.msra.mxu0 0.0
    %938 = vmatpush.msra.mxu0 0.0
    %939 = vmatpush.msra.mxu0 0.0
    %940 = vmatpush.msra.mxu0 %v845
    %941 = vmatpush.msra.mxu0 %v832
    %942 = vmatpush.msra.mxu0 %v826
    %943 = vmatpush.msra.mxu0 %v820
    %944 = vmatpush.msra.mxu0 %v814
    %945 = vmatmul.f32.gmra.mxu0 %v835
    %v946 = vpop.f32.mrf.mxu0
    %v947 = vadd.f32 0.0, %v946
    %948 = vdwg.mxu0
    %949 = vmatpush.msra.mxu0 0.0
    %950 = vmatpush.msra.mxu0 0.0
    %951 = vmatpush.msra.mxu0 0.0
    %952 = vmatpush.msra.mxu0 0.0
    %953 = vmatpush.msra.mxu0 0.0
    %954 = vmatpush.msra.mxu0 0.0
    %955 = vmatpush.msra.mxu0 0.0
    %956 = vmatpush.msra.mxu0 0.0
    %957 = vmatpush.msra.mxu0 0.0
    %958 = vmatpush.msra.mxu0 0.0
    %959 = vmatpush.msra.mxu0 0.0
    %960 = vmatpush.msra.mxu0 %v847
    %961 = vmatpush.msra.mxu0 %v833
    %962 = vmatpush.msra.mxu0 %v827
    %963 = vmatpush.msra.mxu0 %v821
    %964 = vmatpush.msra.mxu0 %v815
    %965 = vmatmul.f32.gmra.mxu0 %v835
    %v966 = vpop.f32.mrf.mxu0
    %v967 = vadd.f32 0.0, %v966
    %968 = vdwg.mxu0
    %v969 = vld [vmem:[%s7] sm:$0xff]
    %v970 = vld [vmem:[%s8] sm:$0xff]
    %v971 = vmul.f32 %v867, %v457
    %v972 = vmul.f32 %v887, %v458
    %v973 = vmul.f32 %v907, %v459
    %v974 = vmul.f32 %v927, %v460
    %v975 = vmul.f32 %v947, %v461
    %v976 = vmul.f32 %v967, %v462
    %v977 = vadd.f32 %v971, %v972
    %v978 = vadd.f32 %v977, %v973
    %v979 = vadd.f32 %v978, %v974
    %v980 = vadd.f32 %v979, %v975
    %vm981 = vcmask 64512
    %v982 = vsel %vm981, %v976, 0.0
    %v983 = vadd.f32 %v980, %v982
    %984 = vadd.xlane.f32.xlu0 %v983
    %v985 = vpop.xlane.xlu0 %984
    %v986 = vmul.f32 %v985, %v495
    %v987 = vsub.f32 %v867, %v986
    %v988 = vsub.f32 %v887, %v986
    %v989 = vsub.f32 %v907, %v986
    %v990 = vsub.f32 %v927, %v986
    %v991 = vsub.f32 %v947, %v986
    %v992 = vsub.f32 %v967, %v986
    %v993 = vmul.f32 %v987, %v987
    %v994 = vmul.f32 %v988, %v988
    %v995 = vmul.f32 %v989, %v989
    %v996 = vmul.f32 %v990, %v990
    %v997 = vmul.f32 %v991, %v991
    %v998 = vmul.f32 %v992, %v992
    %v999 = vmul.f32 %v993, %v457
    %v1000 = vmul.f32 %v994, %v458
    %v1001 = vmul.f32 %v995, %v459
    %v1002 = vmul.f32 %v996, %v460
    %v1003 = vmul.f32 %v997, %v461
    %v1004 = vmul.f32 %v998, %v462
    %v1005 = vadd.f32 %v999, %v1000
    %v1006 = vadd.f32 %v1005, %v1001
    %v1007 = vadd.f32 %v1006, %v1002
    %v1008 = vadd.f32 %v1007, %v1003
    %v1009 = vsel %vm981, %v1004, 0.0
    %v1010 = vadd.f32 %v1008, %v1009
    %1011 = vadd.xlane.f32.xlu0 %v1010
    %v1012 = vpop.xlane.xlu0 %1011
    %v1013 = vmul.f32 %v1012, %v495
    %v1014 = vadd.f32 %v1013, 1e-05
    %v1015 = vrsqrt.pop %v1014
    %v1016 = vmul.f32 %v1015, %v1014
    %v1017 = vmul.f32 %v1016, %v1015
    %v1018 = vmul.f32 0.5, %v1017
    %v1019 = vsub.f32 1.5, %v1018
    %v1020 = vmul.f32 %v1015, %v1019
    %vm1021 = vweird.f32 %v1014
    %vm1022 = vweird.f32 %v1015
    %vm1023 = vmor %vm1021, %vm1022
    %v1024 = vsel %vm1023, %v1015, %v1020
    %v1025 = vmul.f32 %v987, %v1024
    %v1026 = vmul.f32 %v988, %v1024
    %v1027 = vmul.f32 %v989, %v1024
    %v1028 = vmul.f32 %v990, %v1024
    %v1029 = vmul.f32 %v991, %v1024
    %v1030 = vmul.f32 %v992, %v1024
    %1032 = vset.pattern.permute.xlu0 0
    %1033 = vperm.xlu0 %1032, %v969
    %v1034 = vpop.permute.xlu0 %1033
    %v1036 = vmul.f32 %v1025, %v1034
    %v1037 = vmul.f32 %v1026, %v1034
    %v1038 = vmul.f32 %v1027, %v1034
    %v1039 = vmul.f32 %v1028, %v1034
    %v1040 = vmul.f32 %v1029, %v1034
    %v1041 = vmul.f32 %v1030, %v1034
    %1043 = vset.pattern.permute.xlu0 0
    %1044 = vperm.xlu0 %1043, %v970
    %v1045 = vpop.permute.xlu0 %1044
    %v1047 = vadd.f32 %v1036, %v1045
    %v1048 = vadd.f32 %v1037, %v1045
    %v1049 = vadd.f32 %v1038, %v1045
    %v1050 = vadd.f32 %v1039, %v1045
    %v1051 = vadd.f32 %v1040, %v1045
    %v1052 = vadd.f32 %v1041, %v1045
    %v1053 = vld [vmem:[%s4] sm:$0xff]
    %1054 = vst [vmem:[#allocation1] ss:$2 sm:$0xff] %v53
    %s1055 = scalar_lea.vmem [#allocation1], 16
    %1056 = vst [vmem:[%s1055] ss:$2 sm:$0xff] %v54
    %s1057 = scalar_lea.vmem [#allocation1], 32
    %1058 = vst [vmem:[%s1057] ss:$2 sm:$0xff] %v55
    %v1059 = vld.sshfl [vmem:[#allocation1] sm:$0xff pattern:$0x75316420]
    %v1060 = vld.sshfl [vmem:[#allocation1 + $0x8] sm:$0xff pattern:$0x75316420]
    %v1061 = vld.sshfl [vmem:[#allocation1 + $0x10] sm:$0xff pattern:$0x75316420]
    %v1062 = vld.sshfl [vmem:[#allocation1 + $0x18] sm:$0xff pattern:$0x75316420]
    %v1063 = vld.sshfl [vmem:[#allocation1 + $0x20] sm:$0xff pattern:$0x75316420]
    %v1064 = vld.sshfl [vmem:[#allocation1 + $0x28] sm:$0xff pattern:$0x75316420]
    %vm1065 = vcmask 31744
    %v1067 = vsel %vm1065, %v1053, 0
    %v1069 = vsel %vm293, %v1059, 0
    %v1071 = vsel %vm293, %v1060, 0
    %v1073 = vsel %vm293, %v1061, 0
    %v1075 = vsel %vm293, %v1062, 0
    %v1077 = vsel %vm293, %v1063, 0
    %v1079 = vsel %vm293, %v1064, 0
    %1081 = vmatpush.msra.mxu0 0.0
    %1082 = vmatpush.msra.mxu0 0.0
    %1083 = vmatpush.msra.mxu0 0.0
    %1084 = vmatpush.msra.mxu0 0.0
    %1085 = vmatpush.msra.mxu0 0.0
    %1086 = vmatpush.msra.mxu0 0.0
    %1087 = vmatpush.msra.mxu0 0.0
    %1088 = vmatpush.msra.mxu0 0.0
    %1089 = vmatpush.msra.mxu0 0.0
    %1090 = vmatpush.msra.mxu0 0.0
    %1091 = vmatpush.msra.mxu0 0.0
    %1092 = vmatpush.msra.mxu0 0.0
    %1093 = vmatpush.msra.mxu0 0.0
    %1094 = vmatpush.msra.mxu0 0.0
    %1095 = vmatpush.msra.mxu0 0.0
    %1096 = vmatpush.msra.mxu0 %v1069
    %1097 = vmatmul.f32.gmra.mxu0 %v1067
    %v1098 = vpop.f32.mrf.mxu0
    %v1099 = vadd.f32 0.0, %v1098
    %1100 = vdwg.mxu0
    %1101 = vmatpush.msra.mxu0 0.0
    %1102 = vmatpush.msra.mxu0 0.0
    %1103 = vmatpush.msra.mxu0 0.0
    %1104 = vmatpush.msra.mxu0 0.0
    %1105 = vmatpush.msra.mxu0 0.0
    %1106 = vmatpush.msra.mxu0 0.0
    %1107 = vmatpush.msra.mxu0 0.0
    %1108 = vmatpush.msra.mxu0 0.0
    %1109 = vmatpush.msra.mxu0 0.0
    %1110 = vmatpush.msra.mxu0 0.0
    %1111 = vmatpush.msra.mxu0 0.0
    %1112 = vmatpush.msra.mxu0 0.0
    %1113 = vmatpush.msra.mxu0 0.0
    %1114 = vmatpush.msra.mxu0 0.0
    %1115 = vmatpush.msra.mxu0 0.0
    %1116 = vmatpush.msra.mxu0 %v1071
    %1117 = vmatmul.f32.gmra.mxu0 %v1067
    %v1118 = vpop.f32.mrf.mxu0
    %v1119 = vadd.f32 0.0, %v1118
    %1120 = vdwg.mxu0
    %1121 = vmatpush.msra.mxu0 0.0
    %1122 = vmatpush.msra.mxu0 0.0
    %1123 = vmatpush.msra.mxu0 0.0
    %1124 = vmatpush.msra.mxu0 0.0
    %1125 = vmatpush.msra.mxu0 0.0
    %1126 = vmatpush.msra.mxu0 0.0
    %1127 = vmatpush.msra.mxu0 0.0
    %1128 = vmatpush.msra.mxu0 0.0
    %1129 = vmatpush.msra.mxu0 0.0
    %1130 = vmatpush.msra.mxu0 0.0
    %1131 = vmatpush.msra.mxu0 0.0
    %1132 = vmatpush.msra.mxu0 0.0
    %1133 = vmatpush.msra.mxu0 0.0
    %1134 = vmatpush.msra.mxu0 0.0
    %1135 = vmatpush.msra.mxu0 0.0
    %1136 = vmatpush.msra.mxu0 %v1073
    %1137 = vmatmul.f32.gmra.mxu0 %v1067
    %v1138 = vpop.f32.mrf.mxu0
    %v1139 = vadd.f32 0.0, %v1138
    %1140 = vdwg.mxu0
    %1141 = vmatpush.msra.mxu0 0.0
    %1142 = vmatpush.msra.mxu0 0.0
    %1143 = vmatpush.msra.mxu0 0.0
    %1144 = vmatpush.msra.mxu0 0.0
    %1145 = vmatpush.msra.mxu0 0.0
    %1146 = vmatpush.msra.mxu0 0.0
    %1147 = vmatpush.msra.mxu0 0.0
    %1148 = vmatpush.msra.mxu0 0.0
    %1149 = vmatpush.msra.mxu0 0.0
    %1150 = vmatpush.msra.mxu0 0.0
    %1151 = vmatpush.msra.mxu0 0.0
    %1152 = vmatpush.msra.mxu0 0.0
    %1153 = vmatpush.msra.mxu0 0.0
    %1154 = vmatpush.msra.mxu0 0.0
    %1155 = vmatpush.msra.mxu0 0.0
    %1156 = vmatpush.msra.mxu0 %v1075
    %1157 = vmatmul.f32.gmra.mxu0 %v1067
    %v1158 = vpop.f32.mrf.mxu0
    %v1159 = vadd.f32 0.0, %v1158
    %1160 = vdwg.mxu0
    %1161 = vmatpush.msra.mxu0 0.0
    %1162 = vmatpush.msra.mxu0 0.0
    %1163 = vmatpush.msra.mxu0 0.0
    %1164 = vmatpush.msra.mxu0 0.0
    %1165 = vmatpush.msra.mxu0 0.0
    %1166 = vmatpush.msra.mxu0 0.0
    %1167 = vmatpush.msra.mxu0 0.0
    %1168 = vmatpush.msra.mxu0 0.0
    %1169 = vmatpush.msra.mxu0 0.0
    %1170 = vmatpush.msra.mxu0 0.0
    %1171 = vmatpush.msra.mxu0 0.0
    %1172 = vmatpush.msra.mxu0 0.0
    %1173 = vmatpush.msra.mxu0 0.0
    %1174 = vmatpush.msra.mxu0 0.0
    %1175 = vmatpush.msra.mxu0 0.0
    %1176 = vmatpush.msra.mxu0 %v1077
    %1177 = vmatmul.f32.gmra.mxu0 %v1067
    %v1178 = vpop.f32.mrf.mxu0
    %v1179 = vadd.f32 0.0, %v1178
    %1180 = vdwg.mxu0
    %1181 = vmatpush.msra.mxu0 0.0
    %1182 = vmatpush.msra.mxu0 0.0
    %1183 = vmatpush.msra.mxu0 0.0
    %1184 = vmatpush.msra.mxu0 0.0
    %1185 = vmatpush.msra.mxu0 0.0
    %1186 = vmatpush.msra.mxu0 0.0
    %1187 = vmatpush.msra.mxu0 0.0
    %1188 = vmatpush.msra.mxu0 0.0
    %1189 = vmatpush.msra.mxu0 0.0
    %1190 = vmatpush.msra.mxu0 0.0
    %1191 = vmatpush.msra.mxu0 0.0
    %1192 = vmatpush.msra.mxu0 0.0
    %1193 = vmatpush.msra.mxu0 0.0
    %1194 = vmatpush.msra.mxu0 0.0
    %1195 = vmatpush.msra.mxu0 0.0
    %1196 = vmatpush.msra.mxu0 %v1079
    %1197 = vmatmul.f32.gmra.mxu0 %v1067
    %v1198 = vpop.f32.mrf.mxu0
    %v1199 = vadd.f32 0.0, %v1198
    %1200 = vdwg.mxu0
    %v1201 = vld [vmem:[%s9] sm:$0xff]
    %v1202 = vld [vmem:[%s10] sm:$0xff]
    %v1203 = vmul.f32 %v1099, %v457
    %v1204 = vmul.f32 %v1119, %v458
    %v1205 = vmul.f32 %v1139, %v459
    %v1206 = vmul.f32 %v1159, %v460
    %v1207 = vmul.f32 %v1179, %v461
    %v1208 = vmul.f32 %v1199, %v462
    %v1209 = vadd.f32 %v1203, %v1204
    %v1210 = vadd.f32 %v1209, %v1205
    %v1211 = vadd.f32 %v1210, %v1206
    %v1212 = vadd.f32 %v1211, %v1207
    %v1213 = vsel %vm981, %v1208, 0.0
    %v1214 = vadd.f32 %v1212, %v1213
    %1215 = vadd.xlane.f32.xlu0 %v1214
    %v1216 = vpop.xlane.xlu0 %1215
    %v1217 = vmul.f32 %v1216, %v495
    %v1218 = vsub.f32 %v1099, %v1217
    %v1219 = vsub.f32 %v1119, %v1217
    %v1220 = vsub.f32 %v1139, %v1217
    %v1221 = vsub.f32 %v1159, %v1217
    %v1222 = vsub.f32 %v1179, %v1217
    %v1223 = vsub.f32 %v1199, %v1217
    %v1224 = vmul.f32 %v1218, %v1218
    %v1225 = vmul.f32 %v1219, %v1219
    %v1226 = vmul.f32 %v1220, %v1220
    %v1227 = vmul.f32 %v1221, %v1221
    %v1228 = vmul.f32 %v1222, %v1222
    %v1229 = vmul.f32 %v1223, %v1223
    %v1230 = vmul.f32 %v1224, %v457
    %v1231 = vmul.f32 %v1225, %v458
    %v1232 = vmul.f32 %v1226, %v459
    %v1233 = vmul.f32 %v1227, %v460
    %v1234 = vmul.f32 %v1228, %v461
    %v1235 = vmul.f32 %v1229, %v462
    %v1236 = vadd.f32 %v1230, %v1231
    %v1237 = vadd.f32 %v1236, %v1232
    %v1238 = vadd.f32 %v1237, %v1233
    %v1239 = vadd.f32 %v1238, %v1234
    %v1240 = vsel %vm981, %v1235, 0.0
    %v1241 = vadd.f32 %v1239, %v1240
    %1242 = vadd.xlane.f32.xlu0 %v1241
    %v1243 = vpop.xlane.xlu0 %1242
    %v1244 = vmul.f32 %v1243, %v495
    %v1245 = vadd.f32 %v1244, 1e-05
    %v1246 = vrsqrt.pop %v1245
    %v1247 = vmul.f32 %v1246, %v1245
    %v1248 = vmul.f32 %v1247, %v1246
    %v1249 = vmul.f32 0.5, %v1248
    %v1250 = vsub.f32 1.5, %v1249
    %v1251 = vmul.f32 %v1246, %v1250
    %vm1252 = vweird.f32 %v1245
    %vm1253 = vweird.f32 %v1246
    %vm1254 = vmor %vm1252, %vm1253
    %v1255 = vsel %vm1254, %v1246, %v1251
    %v1256 = vmul.f32 %v1218, %v1255
    %v1257 = vmul.f32 %v1219, %v1255
    %v1258 = vmul.f32 %v1220, %v1255
    %v1259 = vmul.f32 %v1221, %v1255
    %v1260 = vmul.f32 %v1222, %v1255
    %v1261 = vmul.f32 %v1223, %v1255
    %1263 = vset.pattern.permute.xlu0 0
    %1264 = vperm.xlu0 %1263, %v1201
    %v1265 = vpop.permute.xlu0 %1264
    %v1267 = vmul.f32 %v1256, %v1265
    %v1268 = vmul.f32 %v1257, %v1265
    %v1269 = vmul.f32 %v1258, %v1265
    %v1270 = vmul.f32 %v1259, %v1265
    %v1271 = vmul.f32 %v1260, %v1265
    %v1272 = vmul.f32 %v1261, %v1265
    %1274 = vset.pattern.permute.xlu0 0
    %1275 = vperm.xlu0 %1274, %v1202
    %v1276 = vpop.permute.xlu0 %1275
    %v1278 = vadd.f32 %v1267, %v1276
    %v1279 = vadd.f32 %v1268, %v1276
    %v1280 = vadd.f32 %v1269, %v1276
    %v1281 = vadd.f32 %v1270, %v1276
    %v1282 = vadd.f32 %v1271, %v1276
    %v1283 = vadd.f32 %v1272, %v1276
    %v1284 = vmul.f32 %v1047, 0.1
    %v1285 = vmul.f32 %v1048, 0.1
    %v1286 = vmul.f32 %v1049, 0.1
    %v1287 = vmul.f32 %v1050, 0.1
    %v1288 = vmul.f32 %v1051, 0.1
    %v1289 = vmul.f32 %v1052, 0.1
    %v1290 = vadd.f32 %v1278, %v1284
    %v1291 = vadd.f32 %v1279, %v1285
    %v1292 = vadd.f32 %v1280, %v1286
    %v1293 = vadd.f32 %v1281, %v1287
    %v1294 = vadd.f32 %v1282, %v1288
    %v1295 = vadd.f32 %v1283, %v1289
    %vm1296 = vcmp.gt.f32.partialorder %v1290, 0.0
    %vm1297 = vcmp.gt.f32.partialorder %v1291, 0.0
    %vm1298 = vcmp.gt.f32.partialorder %v1292, 0.0
    %vm1299 = vcmp.gt.f32.partialorder %v1293, 0.0
    %vm1300 = vcmp.gt.f32.partialorder %v1294, 0.0
    %vm1301 = vcmp.gt.f32.partialorder %v1295, 0.0
    %v1302 = vmul.f32 %v1290, 0.2
    %v1303 = vmul.f32 %v1291, 0.2
    %v1304 = vmul.f32 %v1292, 0.2
    %v1305 = vmul.f32 %v1293, 0.2
    %v1306 = vmul.f32 %v1294, 0.2
    %v1307 = vmul.f32 %v1295, 0.2
    %v1308 = vsel %vm1296, %v1290, %v1302
    %v1309 = vsel %vm1297, %v1291, %v1303
    %v1310 = vsel %vm1298, %v1292, %v1304
    %v1311 = vsel %vm1299, %v1293, %v1305
    %v1312 = vsel %vm1300, %v1294, %v1306
    %v1313 = vsel %vm1301, %v1295, %v1307
    %1314 = vst [vmem:[#allocation5] sm:$0xff] %v1308
    %1315 = vst [vmem:[#allocation5 + $0x8] sm:$0xff] %v1309
    %1316 = vst [vmem:[#allocation5 + $0x10] sm:$0xff] %v1310
    %1317 = vst [vmem:[#allocation5 + $0x18] sm:$0xff] %v1311
    %1318 = vst [vmem:[#allocation5 + $0x20] sm:$0xff] %v1312
    %1319 = vst.msk [vmem:[#allocation5 + $0x28] sm:$0xff] %vm981, %v1313
    // Predicated region
    $region50: #{tpu_custom_call.1} parent=1 // pred_check
      _
    $region51: #{tpu_custom_call.1} parent=1 // pred_check_branch
      %1321 = sbr.rel (0) target = $region53
    $region52: #{tpu_custom_call.1} parent=1 // pred_region
      %1323 = vsyncadd [#allocation4], 0
      %s1325 = sshll.u32 [#allocation5], 4
      %s1326 = int_to_ptr.vmem [resolvable:$true] %s1325
      %s1327 = sshll.u32 %s11, 4
      %s1328 = int_to_ptr.hbm [resolvable:$true] %s1327
      %1330 = dma.vmem_to_hbm [thread:$0]  %s1326, 768, %s1328, [#allocation4]
    $region53: #{tpu_custom_call.1} parent=1 // pred_fallthru
      _
    // Predicated region
    $region54: #{tpu_custom_call.1} parent=1 // pred_check
      _
    $region55: #{tpu_custom_call.1} parent=1 // pred_check_branch
      %1332 = sbr.rel (0) target = $region57
    $region56: #{tpu_custom_call.1} parent=1 // pred_region
      %1334 = dma.done [#allocation4], 768
    $region57: #{tpu_custom_call.1} parent=1 // pred_fallthru
      _
    %1335 = vsyncpa [#allocation3], 1
    %1336 = vsyncpa [#allocation4], 1

</llo_original>
